<compile_context>
chip_gen: v7x
topology: tpu7x:2x2x1
jax: 0.10.0
libtpu: 0.0.40
codegen_flags: <defaults>
</compile_context>

<pallas_src>
import jax
import jax.numpy as jnp
from jax.experimental import pallas as pl
from jax.experimental.pallas import tpu as pltpu

KEYS = ["A1", "B2", "E1", "E2", "E3", "E4", "E5"]
IRREP_DIM = {"A1": 1, "B2": 1, "E1": 2, "E2": 2, "E3": 2, "E4": 2, "E5": 2}
NKEYS = len(KEYS)


# --------------------------------------------------------------------------------------
# Kernel: one MXU matmul per batch tile + a broadcast bias add.  Output is (P, B_tile),
# i.e. batch in lanes -> lane-dense stores.
# --------------------------------------------------------------------------------------
def _d12_fc_out_kernel(u_ref, x_ref, c_ref, o_ref):
    o_ref[...] = (
        jnp.dot(u_ref[...], x_ref[...], preferred_element_type=jnp.float32)
        + c_ref[...]
    )


# --------------------------------------------------------------------------------------
# One-time parameter fold (hoisted out of the per-call path).
# --------------------------------------------------------------------------------------
def precompute_params(q_dict, weight, bias, mult):
    """Fold the whole module into U (P, D) and c (P, 1)."""
    P = q_dict[KEYS[0]].shape[1]
    weight = weight.astype(jnp.float32)
    bias = bias.astype(jnp.float32)
    q32 = {k: q_dict[k].astype(jnp.float32) for k in KEYS}

    M = jnp.stack([q32[k].T @ q32[k] for k in KEYS])                 # (7, P, P)
    c = (jnp.einsum("k,kpq->p", bias, M) / NKEYS).reshape(P, 1)      # (P, 1)

    cols = []
    off = 0
    for k in KEYS:
        d_k, m_k = IRREP_DIM[k], mult[k]
        w_k = weight[:, off:off + m_k]                               # (7, m_k)
        n_k = jnp.einsum("kpq,dq->kpd", M, q32[k])                   # (7, P, d_k)
        u_k = jnp.einsum("km,kpd->pmd", w_k, n_k) / NKEYS            # (P, m_k, d_k)
        cols.append(u_k.reshape(P, m_k * d_k))
        off += m_k
    U = jnp.concatenate(cols, axis=1)                                # (P, D)
    return U, c


def _pack_inputs(d12_vec):
    """Concat per-irrep inputs into X (D, B); row order (irrep, mult, irrep-dim)."""
    rows = []
    for k in KEYS:
        x = d12_vec[k].astype(jnp.float32)                           # (B, d_k, m_k)
        B, d_k, m_k = x.shape
        rows.append(jnp.transpose(x, (2, 1, 0)).reshape(m_k * d_k, B))
    return jnp.concatenate(rows, axis=0)                             # (D, B)


# --------------------------------------------------------------------------------------
# Per-call wrapper: pack inputs, pad batch to a lane-dense tile, one pallas_call.
# --------------------------------------------------------------------------------------
def d12_fc_out(d12_vec, U, c):
    X = _pack_inputs(d12_vec)                                        # (D, B)
    D, B = X.shape
    P = U.shape[0]

    b_tile = 128 if B <= 128 else 512                                # lane-dense tiles
    Bp = ((B + b_tile - 1) // b_tile) * b_tile
    if Bp != B:
        X = jnp.pad(X, ((0, 0), (0, Bp - B)))

    out = pl.pallas_call(
        _d12_fc_out_kernel,
        out_shape=jax.ShapeDtypeStruct((P, Bp), jnp.float32),
        grid=(Bp // b_tile,),
        in_specs=[
            pl.BlockSpec((P, D), lambda b: (0, 0)),                  # folded weights
            pl.BlockSpec((D, b_tile), lambda b: (0, b)),             # batch tile (lanes)
            pl.BlockSpec((P, 1), lambda b: (0, 0)),                  # folded bias
        ],
        out_specs=pl.BlockSpec((P, b_tile), lambda b: (0, b)),
        compiler_params=pltpu.CompilerParams(
            dimension_semantics=("parallel",)),                      # megacore on v7x
    )(U, X, c)
    return out[:, :B].T                                              # (B, P)


# --------------------------------------------------------------------------------------
# Pure-JAX reference mirroring the PyTorch forward op-by-op.
# --------------------------------------------------------------------------------------
def ref_forward(d12_vec, q_dict, weight, bias, mult):
    del mult
    # D12_linear.forward
    perm = jnp.concatenate(
        [jnp.einsum("dp,bdm->bpm", q_dict[k], d12_vec[k]) for k in KEYS], axis=-1)
    perm = jnp.einsum("bpi,oi->bpo", perm, weight) + bias            # nn.Linear
    y = {k: jnp.einsum("dp,bpi->bdi", q_dict[k], perm[..., i:i + 1])
         for i, k in enumerate(KEYS)}
    # D12_FC_out tail
    z = jnp.concatenate(
        [jnp.einsum("dp,bdi->bpi", q_dict[k], y[k]) for k in KEYS], axis=-1)
    return jnp.mean(z, axis=-1)


if __name__ == "__main__":
    B = 2          # batch
    P = 12         # common "point" dimension of the Q change-of-basis matrices
    mult = {k: 4 for k in KEYS}   # input multiplicities -> din = 28, dout = 7

    key = jax.random.PRNGKey(0)
    k_q, k_x, k_w, k_b = jax.random.split(key, 4)
    q_keys = jax.random.split(k_q, NKEYS)
    x_keys = jax.random.split(k_x, NKEYS)

    # Deterministic synthetic D12_Q matrices and per-irrep input vectors.
    q_dict = {k: jax.random.normal(q_keys[i], (IRREP_DIM[k], P), jnp.float32)
              for i, k in enumerate(KEYS)}
    d12_vec = {k: jax.random.normal(x_keys[i], (B, IRREP_DIM[k], mult[k]), jnp.float32)
               for i, k in enumerate(KEYS)}

    # Deterministic nn.Linear(din, 7)-style parameters.
    din = sum(mult.values())
    bound = 1.0 / (din ** 0.5)
    weight = jax.random.uniform(k_w, (NKEYS, din), jnp.float32, -bound, bound)
    bias = jax.random.uniform(k_b, (NKEYS,), jnp.float32, -bound, bound)

    # One-time parameter fold (not part of the per-call path).
    U, c = precompute_params(q_dict, weight, bias, mult)

    out = jax.block_until_ready(d12_fc_out(d12_vec, U, c))
    ref = jax.block_until_ready(ref_forward(d12_vec, q_dict, weight, bias, mult))

    assert out.shape == (B, P), out.shape
    assert jnp.allclose(out, ref, atol=1e-3, rtol=1e-3), (out, ref)
    print("KERNEL_OK")
</pallas_src>

<mosaic_0001>
module attributes {stable_mosaic.version = 11 : i64} {
  func.func @_d12_fc_out_kernel(%arg0: i32, %arg1: memref<12x48xf32, #tpu.memory_space<vmem>>, %arg2: memref<48x128xf32, #tpu.memory_space<vmem>>, %arg3: memref<12x1xf32, #tpu.memory_space<vmem>>, %arg4: memref<12x128xf32, #tpu.memory_space<vmem>>) attributes {dimension_semantics = [#tpu.dimension_semantics<parallel>], iteration_bounds = array<i64: 1>, scalar_prefetch = 0 : i64, scratch_operands = 0 : i64, tpu.core_type = #tpu.core_type<tc>, window_params = [{pipeline_mode = #tpu.pipeline_mode<synchronous>, transform_indices = @transform_0, window_bounds = array<i64: 12, 48>}, {transform_indices = @transform_1, window_bounds = array<i64: 48, 128>}, {pipeline_mode = #tpu.pipeline_mode<synchronous>, transform_indices = @transform_2, window_bounds = array<i64: 12, 1>}, {transform_indices = @transform_3, window_bounds = array<i64: 12, 128>}]} {
    %c0 = arith.constant 0 : index
    %c0_0 = arith.constant 0 : index
    %0 = vector.load %arg1[%c0, %c0_0] : memref<12x48xf32, #tpu.memory_space<vmem>>, vector<12x48xf32>
    %c0_1 = arith.constant 0 : index
    %c0_2 = arith.constant 0 : index
    %1 = vector.load %arg2[%c0_1, %c0_2] : memref<48x128xf32, #tpu.memory_space<vmem>>, vector<48x128xf32>
    %cst = arith.constant dense<0.000000e+00> : vector<12x128xf32>
    %2 = tpu.matmul %0, %1, %cst {dimension_numbers = #tpu.dot_dimension_numbers<[1], [0], [0], [1], [0, 0, 1, 1], [], []>} : vector<12x48xf32>, vector<48x128xf32>, vector<12x128xf32> -> vector<12x128xf32>
    %c0_3 = arith.constant 0 : index
    %c0_4 = arith.constant 0 : index
    %3 = vector.load %arg3[%c0_3, %c0_4] : memref<12x1xf32, #tpu.memory_space<vmem>>, vector<12x1xf32>
    %4 = vector.broadcast %3 : vector<12x1xf32> to vector<12x128xf32>
    %5 = arith.addf %2, %4 : vector<12x128xf32>
    %c0_5 = arith.constant 0 : index
    %c0_6 = arith.constant 0 : index
    %6 = vector.load %arg4[%c0_5, %c0_6] : memref<12x128xf32, #tpu.memory_space<vmem>>, vector<12x128xf32>
    tpu.vector_store %arg4[%c0_5, %c0_6], %5 {strides = array<i32>} : memref<12x128xf32, #tpu.memory_space<vmem>>, vector<12x128xf32>,
    return
  }
  func.func @transform_0(%arg0: i32) -> (i32, i32) {
    %c0_i32 = arith.constant 0 : i32
    %c0_i32_0 = arith.constant 0 : i32
    %c0_i32_1 = arith.constant 0 : i32
    return %c0_i32, %c0_i32_0 : i32, i32
  }
  func.func @transform_1(%arg0: i32) -> (i32, i32) {
    %c0_i32 = arith.constant 0 : i32
    %c0_i32_0 = arith.constant 0 : i32
    return %c0_i32, %arg0 : i32, i32
  }
  func.func @transform_2(%arg0: i32) -> (i32, i32) {
    %c0_i32 = arith.constant 0 : i32
    %c0_i32_0 = arith.constant 0 : i32
    %c0_i32_1 = arith.constant 0 : i32
    return %c0_i32, %c0_i32_0 : i32, i32
  }
  func.func @transform_3(%arg0: i32) -> (i32, i32) {
    %c0_i32 = arith.constant 0 : i32
    %c0_i32_0 = arith.constant 0 : i32
    return %c0_i32, %arg0 : i32, i32
  }
}

</mosaic_0001>

<llo_original>
// kernel: tpu_custom_call.1
$region0: #{tpu_custom_call.1}
  #allocation0 [shape = 'u32[]', space=smem, size = 0x4, offset = 0x4, fixed_abs, tag = 'smem constant byte address 0x4 - core index']
  #allocation1 [shape = 'u32[144,128]{1,0:T(1,128)}', space=vmem, size = 0x12000, scoped, tag = 'internal scratch']
  %s0 = inlined_call_operand.vmem [shape: f32[12,48], index: 0, kind: input, shape index: {}]
  %s1 = inlined_call_operand.hbm [shape: f32[48,128], index: 1, kind: input, shape index: {}]
  %s2 = inlined_call_operand.vmem [shape: f32[12,1], index: 2, kind: input, shape index: {}]
  %s3 = inlined_call_operand.hbm [shape: f32[12,128], index: 3, kind: output, shape index: {}]
  %s4 = sld [smem:[#allocation0]]
  $region26: #{tpu_custom_call.1} parent=0
    _
  %s6 = ssub.s32 1, %s4
  %s7 = scalar_select 0, %s6, %s4
  $region1: #{tpu_custom_call.1} parent=0
    #allocation2 [shape = 'u8[24576]{0}', space=vmem, size = 0x6000, scoped, tag = 'input window, operand 1, single buffered']
    #allocation3 [shape = 's32[1]{0}', space=sflag, size = 0x4, scoped, tag = 'scoped memory for tpu_custom_call.1']
    #allocation4 [shape = 's32[1]{0}', space=sflag, size = 0x4, scoped, tag = 'scoped memory for tpu_custom_call.1']
    #allocation5 [shape = 'u8[8192]{0}', space=vmem, size = 0x2000, scoped, tag = 'output window, operand 0, single buffered']
    %8 = vsyncpa [#allocation3], 0
    %9 = vsyncpa [#allocation4], 0
    // Predicated region
    $region2: #{tpu_custom_call.1} parent=1 // pred_check
      _
    $region3: #{tpu_custom_call.1} parent=1 // pred_check_branch
      %11 = sbr.rel (0) target = $region5
    $region4: #{tpu_custom_call.1} parent=1 // pred_region
      _
    $region5: #{tpu_custom_call.1} parent=1 // pred_fallthru
      _
    // Predicated region
    $region6: #{tpu_custom_call.1} parent=1 // pred_check
      _
    $region7: #{tpu_custom_call.1} parent=1 // pred_check_branch
      %13 = sbr.rel (0) target = $region9
    $region8: #{tpu_custom_call.1} parent=1 // pred_region
      %s15 = ssub.s32 768, 768
      %16 = vsyncadd [#allocation3], %s15
      %s17 = sshll.u32 [#allocation2], 4
      %s18 = int_to_ptr.vmem [resolvable:$true] %s17
      %23 = dma.hbm_to_vmem [thread:$0]  %s1, 768, %s18, [#allocation3], 128, 128, 8
    $region9: #{tpu_custom_call.1} parent=1 // pred_fallthru
      _
    // Predicated region
    $region10: #{tpu_custom_call.1} parent=1 // pred_check
      _
    $region11: #{tpu_custom_call.1} parent=1 // pred_check_branch
      %25 = sbr.rel (0) target = $region13
    $region12: #{tpu_custom_call.1} parent=1 // pred_region
      _
    $region13: #{tpu_custom_call.1} parent=1 // pred_fallthru
      _
    // Predicated region
    $region14: #{tpu_custom_call.1} parent=1 // pred_check
      _
    $region15: #{tpu_custom_call.1} parent=1 // pred_check_branch
      %27 = sbr.rel (0) target = $region17
    $region16: #{tpu_custom_call.1} parent=1 // pred_region
      %28 = dma.done [#allocation3], 768
    $region17: #{tpu_custom_call.1} parent=1 // pred_fallthru
      _
    %v29 = vld [vmem:[%s0] sm:$0xff]
    %v30 = vld [vmem:[%s0 + $0x8] sm:$0xf]
    %v31 = vld [vmem:[#allocation2] sm:$0xff]
    %v32 = vld [vmem:[#allocation2 + $0x8] sm:$0xff]
    %v33 = vld [vmem:[#allocation2 + $0x10] sm:$0xff]
    %v34 = vld [vmem:[#allocation2 + $0x18] sm:$0xff]
    %v35 = vld [vmem:[#allocation2 + $0x20] sm:$0xff]
    %v36 = vld [vmem:[#allocation2 + $0x28] sm:$0xff]
    %v37 = vld [vmem:[%s2] sm:$0xff]
    %v38 = vld [vmem:[%s2 + $0x8] sm:$0xf]
    %40 = vset.pattern.permute.xlu0 0
    %41 = vperm.xlu0 %40, %v37
    %v42 = vpop.permute.xlu0 %41
    %45 = vset.pattern.permute.xlu0 0
    %46 = vperm.xlu0 %45, %v38
    %v47 = vpop.permute.xlu0 %46
    %vm49 = vcmask 392192
    %v51 = vsel %vm49, %v29, 0
    %v54 = vsel %vm49, %v30, 0
    %56 = vmatprep.subr.mxu0 0.0
    %57 = vmatpush1.msra.mxu0 %v31
    %58 = vmatprep.subr.mxu0 0.0
    %59 = vmatpush1.msra.mxu0 %v32
    %60 = vmatprep.subr.mxu0 0.0
    %61 = vmatpush1.msra.mxu0 %v33
    %62 = vmatprep.subr.mxu0 0.0
    %63 = vmatpush1.msra.mxu0 %v34
    %64 = vmatprep.subr.mxu0 0.0
    %65 = vmatpush1.msra.mxu0 %v35
    %66 = vmatprep.subr.mxu0 0.0
    %67 = vmatpush1.msra.mxu0 %v36
    %68 = vmatprep.subr.mxu0 0.0
    %69 = vmatpush1.msra.mxu0 0.0
    %70 = vmatprep.subr.mxu0 0.0
    %71 = vmatpush1.msra.mxu0 0.0
    %72 = vmatprep.subr.mxu0 0.0
    %73 = vmatpush1.msra.mxu0 0.0
    %74 = vmatprep.subr.mxu0 0.0
    %75 = vmatpush1.msra.mxu0 0.0
    %76 = vmatprep.subr.mxu0 0.0
    %77 = vmatpush1.msra.mxu0 0.0
    %78 = vmatprep.subr.mxu0 0.0
    %79 = vmatpush1.msra.mxu0 0.0
    %80 = vmatprep.subr.mxu0 0.0
    %81 = vmatpush1.msra.mxu0 0.0
    %82 = vmatprep.subr.mxu0 0.0
    %83 = vmatpush1.msra.mxu0 0.0
    %84 = vmatprep.subr.mxu0 0.0
    %85 = vmatpush1.msra.mxu0 0.0
    %86 = vmatprep.subr.mxu0 0.0
    %87 = vmatpush1.msra.mxu0 0.0
    %88 = vmatprep.subr.mxu0 0.0
    %89 = vmatpush1.msra.mxu0 0.0
    %90 = vmatprep.subr.mxu0 0.0
    %91 = vmatpush1.msra.mxu0 0.0
    %92 = vmatprep.subr.mxu0 0.0
    %93 = vmatpush1.msra.mxu0 0.0
    %94 = vmatprep.subr.mxu0 0.0
    %95 = vmatpush1.msra.mxu0 0.0
    %96 = vmatprep.subr.mxu0 0.0
    %97 = vmatpush1.msra.mxu0 0.0
    %98 = vmatprep.subr.mxu0 0.0
    %99 = vmatpush1.msra.mxu0 0.0
    %100 = vmatprep.subr.mxu0 0.0
    %101 = vmatpush1.msra.mxu0 0.0
    %102 = vmatprep.subr.mxu0 0.0
    %103 = vmatpush1.msra.mxu0 0.0
    %104 = vmatprep.subr.mxu0 0.0
    %105 = vmatpush1.msra.mxu0 0.0
    %106 = vmatprep.subr.mxu0 0.0
    %107 = vmatpush1.msra.mxu0 0.0
    %108 = vmatprep.subr.mxu0 0.0
    %109 = vmatpush1.msra.mxu0 0.0
    %110 = vmatprep.subr.mxu0 0.0
    %111 = vmatpush1.msra.mxu0 0.0
    %112 = vmatprep.subr.mxu0 0.0
    %113 = vmatpush1.msra.mxu0 0.0
    %114 = vmatprep.subr.mxu0 0.0
    %115 = vmatpush1.msra.mxu0 0.0
    %116 = vmatprep.subr.mxu0 0.0
    %117 = vmatpush1.msra.mxu0 0.0
    %118 = vmatprep.subr.mxu0 0.0
    %119 = vmatpush1.msra.mxu0 0.0
    %120 = vmatprep.mubr.f32.mxu0 0.0
    %121 = vmatmul.mubr.f32.gmra.mrb[0].mxu0 %v51
    %v122 = vpop.f32.mrb[0].mxu0
    %v123 = vadd.f32 %v42, %v122
    %v124 = vpop.f32.mrb[0].mxu0
    %125 = vmatprep.mubr.f32.mxu0 0.0
    %126 = vmatmul.mubr.f32.gmra.mrb[0].mxu0 %v54
    %v127 = vpop.f32.mrb[0].mxu0
    %v128 = vadd.f32 %v47, %v127
    %v129 = vpop.f32.mrb[0].mxu0
    %130 = vdwg.mxu0
    %131 = vst [vmem:[#allocation5] sm:$0xff] %v123
    %132 = vst [vmem:[#allocation5 + $0x8] sm:$0xf] %v128
    // Predicated region
    $region18: #{tpu_custom_call.1} parent=1 // pred_check
      _
    $region19: #{tpu_custom_call.1} parent=1 // pred_check_branch
      %134 = sbr.rel (0) target = $region21
    $region20: #{tpu_custom_call.1} parent=1 // pred_region
      %s136 = ssub.s32 256, 256
      %137 = vsyncadd [#allocation4], %s136
      %s138 = sshll.u32 [#allocation5], 4
      %s139 = int_to_ptr.vmem [resolvable:$true] %s138
      %144 = dma.vmem_to_hbm [thread:$0]  %s139, 256, %s3, [#allocation4], 128, 128, 8
    $region21: #{tpu_custom_call.1} parent=1 // pred_fallthru
      _
    // Predicated region
    $region22: #{tpu_custom_call.1} parent=1 // pred_check
      _
    $region23: #{tpu_custom_call.1} parent=1 // pred_check_branch
      %146 = sbr.rel (0) target = $region25
    $region24: #{tpu_custom_call.1} parent=1 // pred_region
      %147 = dma.done [#allocation4], 256
    $region25: #{tpu_custom_call.1} parent=1 // pred_fallthru
      _
    %148 = vsyncpa [#allocation3], 1
    %149 = vsyncpa [#allocation4], 1

</llo_original>
